<compile_context>
chip_gen: v7x
topology: tpu7x:2x2x1
jax: 0.10.0
libtpu: 0.0.40
codegen_flags: <defaults>
</compile_context>

<pallas_src>
from functools import partial

import jax
import jax.numpy as jnp
from jax.experimental import pallas as pl
from jax.experimental.pallas import tpu as pltpu


# ----------------------------------------------------------------------------
# Channel-split bookkeeping (replicates MAConv.__init__ exactly, including the
# `in_channels` quirk in the last out_split).
# ----------------------------------------------------------------------------
def _maconv_split_sizes(in_channels, out_channels, num_split):
    splits = [1.0 / num_split] * num_split
    in_split, in_split_rest, out_split = [], [], []
    for i in range(num_split):
        isp = (round(in_channels * splits[i]) if i < num_split - 1
               else in_channels - sum(in_split))
        in_split.append(isp)
        in_split_rest.append(in_channels - isp)
        osp = (round(out_channels * splits[i]) if i < num_split - 1
               else in_channels - sum(out_split))  # matches original code
        out_split.append(osp)
    return in_split, in_split_rest, out_split


# ----------------------------------------------------------------------------
# Kernel 1: mutual-affine modulation  v_i = x_i * sigmoid(scale_i) + trans_i
# Block = (C_in, H*W) per batch element (lane-dense last axis).
# ----------------------------------------------------------------------------
def _make_modulate_kernel(in_split, hidden, c_in):
    num_split = len(in_split)
    starts = [sum(in_split[:i]) for i in range(num_split)]

    def kernel(*refs):
        x_ref = refs[0]          # (C_in, HW) VMEM
        o_ref = refs[-1]         # (C_in, HW) VMEM
        wrefs = refs[1:-1]       # flattened fc weights/biases in SMEM

        for i in range(num_split):
            cs, isp, hid = starts[i], in_split[i], hidden[i]
            rest_idx = [c for c in range(c_in) if not (cs <= c < cs + isp)]
            r_cnt = len(rest_idx)
            w1, b1, w2, b2 = wrefs[4 * i:4 * i + 4]

            # Load the "other split" channel planes once (f32).
            xr = [x_ref[c, :].astype(jnp.float32) for c in rest_idx]

            # fc1 (1x1 conv) + ReLU — unrolled scalar-broadcast MACs on the VPU.
            h = []
            for m in range(hid):
                acc = xr[0] * w1[m * r_cnt + 0]
                for r in range(1, r_cnt):
                    acc = acc + xr[r] * w1[m * r_cnt + r]
                h.append(jnp.maximum(acc + b1[m], 0.0))

            # fc2 (1x1 conv) -> (scale, translation), then affine modulation.
            for cl in range(isp):
                sacc = h[0] * w2[cl * hid + 0]
                tacc = h[0] * w2[(isp + cl) * hid + 0]
                for m in range(1, hid):
                    sacc = sacc + h[m] * w2[cl * hid + m]
                    tacc = tacc + h[m] * w2[(isp + cl) * hid + m]
                scale = sacc + b2[cl]
                trans = tacc + b2[isp + cl]
                sig = 1.0 / (1.0 + jnp.exp(-scale))          # EUP exp
                xi = x_ref[cs + cl, :].astype(jnp.float32)
                o_ref[cs + cl, :] = (xi * sig + trans).astype(o_ref.dtype)

    return kernel


# ----------------------------------------------------------------------------
# Kernel 2: per-split k x k convolution (grouped conv) over the modulated,
# zero-padded tensor.  Block = (C_in, Hp, Wp) / (C_out, Ho, Wo) per batch.
# ----------------------------------------------------------------------------
def _make_groupconv_kernel(in_split, out_split, k_sz, Ho, Wo):
    num_split = len(in_split)
    in_starts = [sum(in_split[:i]) for i in range(num_split)]
    out_starts = [sum(out_split[:i]) for i in range(num_split)]

    def kernel(*refs):
        vp_ref = refs[0]         # (C_in, Hp, Wp) VMEM, zero-padded
        o_ref = refs[-1]         # (C_out, Ho, Wo) VMEM
        wrefs = refs[1:-1]       # flattened conv weights / biases in SMEM

        for i in range(num_split):
            cs, isp = in_starts[i], in_split[i]
            osp, ob = out_split[i], out_starts[i]
            w, b = wrefs[2 * i], wrefs[2 * i + 1]

            # f32 accumulators, initialized with the conv bias.
            accs = [jnp.zeros((Ho, Wo), jnp.float32) + b[o] for o in range(osp)]

            # Each tap slice is loaded once and reused across all out channels.
            for ci in range(isp):
                for di in range(k_sz):
                    for dj in range(k_sz):
                        patch = vp_ref[cs + ci,
                                       di:di + Ho,
                                       dj:dj + Wo].astype(jnp.float32)
                        for o in range(osp):
                            widx = ((o * isp + ci) * k_sz + di) * k_sz + dj
                            accs[o] = accs[o] + w[widx] * patch

            for o in range(osp):
                o_ref[ob + o] = accs[o].astype(o_ref.dtype)

    return kernel


# ----------------------------------------------------------------------------
# Wrapper
# ----------------------------------------------------------------------------
def maconv_forward(x, params, *, out_channels, kernel_size, stride, padding,
                   num_split=2, reduction=2):
    # TODO(synk): stride > 1 would need strided tap slicing; MAConv in D2SR uses stride=1.
    assert stride == 1, "only stride=1 is implemented"
    B, C_in, H, W = x.shape
    in_split, in_split_rest, out_split = _maconv_split_sizes(
        C_in, out_channels, num_split)
    hidden = [int(r // reduction) for r in in_split_rest]
    assert all(h >= 1 for h in hidden), "reduction too large for this channel count"
    C_out = sum(out_split)
    HW = H * W
    k, p = kernel_size, padding

    smem_spec = pl.BlockSpec(memory_space=pltpu.MemorySpace.SMEM)

    # ---- Kernel 1: modulation on a lane-dense (C_in, H*W) layout --------------
    x2 = x.reshape(B, C_in, HW)
    mod_inputs = [x2]
    mod_specs = [pl.BlockSpec((None, C_in, HW), lambda b: (b, 0, 0))]
    for i in range(num_split):
        pi = params[i]
        mod_inputs += [pi['w1'].reshape(-1).astype(jnp.float32),
                       pi['b1'].reshape(-1).astype(jnp.float32),
                       pi['w2'].reshape(-1).astype(jnp.float32),
                       pi['b2'].reshape(-1).astype(jnp.float32)]
        mod_specs += [smem_spec] * 4

    v2 = pl.pallas_call(
        _make_modulate_kernel(in_split, hidden, C_in),
        out_shape=jax.ShapeDtypeStruct((B, C_in, HW), jnp.float32),
        grid=(B,),
        in_specs=mod_specs,
        out_specs=pl.BlockSpec((None, C_in, HW), lambda b: (b, 0, 0)),
        compiler_params=pltpu.CompilerParams(
            dimension_semantics=("parallel",)),
    )(*mod_inputs)

    # ---- Zero-pad the modulated tensor (conv 'same' padding) ------------------
    v = v2.reshape(B, C_in, H, W)
    vp = jnp.pad(v, ((0, 0), (0, 0), (p, p), (p, p)))
    Hp, Wp = H + 2 * p, W + 2 * p
    Ho, Wo = Hp - k + 1, Wp - k + 1

    # ---- Kernel 2: grouped k x k convolution ----------------------------------
    conv_inputs = [vp]
    conv_specs = [pl.BlockSpec((None, C_in, Hp, Wp), lambda b: (b, 0, 0, 0))]
    for i in range(num_split):
        pi = params[i]
        conv_inputs += [pi['wc'].reshape(-1).astype(jnp.float32),
                        pi['bc'].reshape(-1).astype(jnp.float32)]
        conv_specs += [smem_spec] * 2

    out = pl.pallas_call(
        _make_groupconv_kernel(in_split, out_split, k, Ho, Wo),
        out_shape=jax.ShapeDtypeStruct((B, C_out, Ho, Wo), x.dtype),
        grid=(B,),
        in_specs=conv_specs,
        out_specs=pl.BlockSpec((None, C_out, Ho, Wo), lambda b: (b, 0, 0, 0)),
        compiler_params=pltpu.CompilerParams(
            dimension_semantics=("parallel",)),
    )(*conv_inputs)
    return out


# ----------------------------------------------------------------------------
# Pure-JAX reference replicating the PyTorch forward exactly.
# ----------------------------------------------------------------------------
def maconv_ref(x, params, *, out_channels, kernel_size, stride, padding,
               num_split=2, reduction=2):
    B, C_in, H, W = x.shape
    in_split, _, out_split = _maconv_split_sizes(C_in, out_channels, num_split)
    xs, cs = [], 0
    for isp in in_split:
        xs.append(x[:, cs:cs + isp])
        cs += isp
    outs = []
    for i in range(num_split):
        pi = params[i]
        rest = jnp.concatenate(xs[:i] + xs[i + 1:], axis=1)
        h = jnp.einsum('bchw,mc->bmhw', rest, pi['w1']) \
            + pi['b1'][None, :, None, None]
        h = jnp.maximum(h, 0.0)
        st = jnp.einsum('bmhw,om->bohw', h, pi['w2']) \
            + pi['b2'][None, :, None, None]
        isp = in_split[i]
        scale, trans = st[:, :isp], st[:, isp:]
        v = xs[i] * jax.nn.sigmoid(scale) + trans
        o = jax.lax.conv_general_dilated(
            v, pi['wc'], window_strides=(stride, stride),
            padding=[(padding, padding), (padding, padding)],
            dimension_numbers=('NCHW', 'OIHW', 'NCHW'))
        o = o + pi['bc'][None, :, None, None]
        outs.append(o)
    return jnp.concatenate(outs, axis=1)


if __name__ == "__main__":
    B, C_in, C_out, H, W = 2, 4, 4, 16, 16
    k_sz, stride, padding = 3, 1, 1
    num_split, reduction = 2, 2

    in_split, in_split_rest, out_split = _maconv_split_sizes(C_in, C_out, num_split)
    hidden = [int(r // reduction) for r in in_split_rest]

    key = jax.random.PRNGKey(0)
    keys = jax.random.split(key, 1 + 6 * num_split)
    x = jax.random.normal(keys[0], (B, C_in, H, W), dtype=jnp.float32)

    params, kk = [], 1
    for i in range(num_split):
        w1 = 0.5 * jax.random.normal(keys[kk], (hidden[i], in_split_rest[i]), jnp.float32); kk += 1
        b1 = 0.1 * jax.random.normal(keys[kk], (hidden[i],), jnp.float32); kk += 1
        w2 = 0.5 * jax.random.normal(keys[kk], (2 * in_split[i], hidden[i]), jnp.float32); kk += 1
        b2 = 0.1 * jax.random.normal(keys[kk], (2 * in_split[i],), jnp.float32); kk += 1
        wc = 0.5 * jax.random.normal(keys[kk], (out_split[i], in_split[i], k_sz, k_sz), jnp.float32); kk += 1
        bc = 0.1 * jax.random.normal(keys[kk], (out_split[i],), jnp.float32); kk += 1
        params.append(dict(w1=w1, b1=b1, w2=w2, b2=b2, wc=wc, bc=bc))

    out = maconv_forward(x, params, out_channels=C_out, kernel_size=k_sz,
                         stride=stride, padding=padding,
                         num_split=num_split, reduction=reduction)
    out = jax.block_until_ready(out)

    ref = maconv_ref(x, params, out_channels=C_out, kernel_size=k_sz,
                     stride=stride, padding=padding,
                     num_split=num_split, reduction=reduction)

    assert out.shape == (B, C_out, H, W), out.shape
    assert jnp.allclose(out, ref, atol=1e-4, rtol=1e-4), \
        float(jnp.max(jnp.abs(out - ref)))
    print("KERNEL_OK")
</pallas_src>

<mosaic_0001>
module attributes {stable_mosaic.version = 11 : i64} {
  func.func @kernel(%arg0: i32, %arg1: memref<1x4x256xf32, #tpu.memory_space<vmem>>, %arg2: memref<2xf32, #tpu.memory_space<smem>>, %arg3: memref<1xf32, #tpu.memory_space<smem>>, %arg4: memref<4xf32, #tpu.memory_space<smem>>, %arg5: memref<4xf32, #tpu.memory_space<smem>>, %arg6: memref<2xf32, #tpu.memory_space<smem>>, %arg7: memref<1xf32, #tpu.memory_space<smem>>, %arg8: memref<4xf32, #tpu.memory_space<smem>>, %arg9: memref<4xf32, #tpu.memory_space<smem>>, %arg10: memref<1x4x256xf32, #tpu.memory_space<vmem>>) attributes {dimension_semantics = [#tpu.dimension_semantics<parallel>], iteration_bounds = array<i64: 2>, scalar_prefetch = 0 : i64, scratch_operands = 0 : i64, tpu.core_type = #tpu.core_type<tc>, window_params = [{transform_indices = @transform_0, window_bounds = array<i64: 1, 4, 256>}, {transform_indices = @transform_1, window_bounds = array<i64: 2>}, {transform_indices = @transform_2, window_bounds = array<i64: 1>}, {transform_indices = @transform_3, window_bounds = array<i64: 4>}, {transform_indices = @transform_4, window_bounds = array<i64: 4>}, {transform_indices = @transform_5, window_bounds = array<i64: 2>}, {transform_indices = @transform_6, window_bounds = array<i64: 1>}, {transform_indices = @transform_7, window_bounds = array<i64: 4>}, {transform_indices = @transform_8, window_bounds = array<i64: 4>}, {transform_indices = @transform_9, window_bounds = array<i64: 1, 4, 256>}]} {
    %c0 = arith.constant 0 : index
    %c2 = arith.constant 2 : index
    %c0_0 = arith.constant 0 : index
    %0 = vector.load %arg1[%c0, %c2, %c0_0] : memref<1x4x256xf32, #tpu.memory_space<vmem>>, vector<1x1x256xf32>
    %1 = vector.shape_cast %0 : vector<1x1x256xf32> to vector<256xf32>
    %c0_1 = arith.constant 0 : index
    %c3 = arith.constant 3 : index
    %c0_2 = arith.constant 0 : index
    %2 = vector.load %arg1[%c0_1, %c3, %c0_2] : memref<1x4x256xf32, #tpu.memory_space<vmem>>, vector<1x1x256xf32>
    %3 = vector.shape_cast %2 : vector<1x1x256xf32> to vector<256xf32>
    %c0_3 = arith.constant 0 : index
    %4 = memref.load %arg2[%c0_3] : memref<2xf32, #tpu.memory_space<smem>>
    %5 = vector.broadcast %4 : f32 to vector<256xf32>
    %6 = arith.mulf %1, %5 : vector<256xf32>
    %c1 = arith.constant 1 : index
    %7 = memref.load %arg2[%c1] : memref<2xf32, #tpu.memory_space<smem>>
    %8 = vector.broadcast %7 : f32 to vector<256xf32>
    %9 = arith.mulf %3, %8 : vector<256xf32>
    %10 = arith.addf %6, %9 : vector<256xf32>
    %c0_4 = arith.constant 0 : index
    %11 = memref.load %arg3[%c0_4] : memref<1xf32, #tpu.memory_space<smem>>
    %12 = vector.broadcast %11 : f32 to vector<256xf32>
    %13 = arith.addf %10, %12 : vector<256xf32>
    %cst = arith.constant 0.000000e+00 : f32
    %14 = vector.broadcast %cst : f32 to vector<256xf32>
    %15 = arith.maximumf %13, %14 : vector<256xf32>
    %c0_5 = arith.constant 0 : index
    %16 = memref.load %arg4[%c0_5] : memref<4xf32, #tpu.memory_space<smem>>
    %17 = vector.broadcast %16 : f32 to vector<256xf32>
    %18 = arith.mulf %15, %17 : vector<256xf32>
    %c2_6 = arith.constant 2 : index
    %19 = memref.load %arg4[%c2_6] : memref<4xf32, #tpu.memory_space<smem>>
    %20 = vector.broadcast %19 : f32 to vector<256xf32>
    %21 = arith.mulf %15, %20 : vector<256xf32>
    %c0_7 = arith.constant 0 : index
    %22 = memref.load %arg5[%c0_7] : memref<4xf32, #tpu.memory_space<smem>>
    %23 = vector.broadcast %22 : f32 to vector<256xf32>
    %24 = arith.addf %18, %23 : vector<256xf32>
    %c2_8 = arith.constant 2 : index
    %25 = memref.load %arg5[%c2_8] : memref<4xf32, #tpu.memory_space<smem>>
    %26 = vector.broadcast %25 : f32 to vector<256xf32>
    %27 = arith.addf %21, %26 : vector<256xf32>
    %cst_9 = arith.constant 0.000000e+00 : f32
    %28 = vector.broadcast %cst_9 : f32 to vector<256xf32>
    %29 = arith.subf %28, %24 : vector<256xf32>
    %30 = math.exp %29 : vector<256xf32>
    %cst_10 = arith.constant 1.000000e+00 : f32
    %31 = vector.broadcast %cst_10 : f32 to vector<256xf32>
    %32 = arith.addf %31, %30 : vector<256xf32>
    %cst_11 = arith.constant 1.000000e+00 : f32
    %33 = vector.broadcast %cst_11 : f32 to vector<256xf32>
    %34 = arith.divf %33, %32 : vector<256xf32>
    %c0_12 = arith.constant 0 : index
    %c0_13 = arith.constant 0 : index
    %c0_14 = arith.constant 0 : index
    %35 = vector.load %arg1[%c0_12, %c0_13, %c0_14] : memref<1x4x256xf32, #tpu.memory_space<vmem>>, vector<1x1x256xf32>
    %36 = vector.shape_cast %35 : vector<1x1x256xf32> to vector<256xf32>
    %37 = arith.mulf %36, %34 : vector<256xf32>
    %38 = arith.addf %37, %27 : vector<256xf32>
    %c0_15 = arith.constant 0 : index
    %c0_16 = arith.constant 0 : index
    %c0_17 = arith.constant 0 : index
    %39 = vector.load %arg10[%c0_15, %c0_16, %c0_17] : memref<1x4x256xf32, #tpu.memory_space<vmem>>, vector<1x1x256xf32>
    %40 = vector.shape_cast %39 : vector<1x1x256xf32> to vector<256xf32>
    %41 = vector.shape_cast %38 : vector<256xf32> to vector<1x1x256xf32>
    tpu.vector_store %arg10[%c0_15, %c0_16, %c0_17], %41 {strides = array<i32>} : memref<1x4x256xf32, #tpu.memory_space<vmem>>, vector<1x1x256xf32>,
    %c1_18 = arith.constant 1 : index
    %42 = memref.load %arg4[%c1_18] : memref<4xf32, #tpu.memory_space<smem>>
    %43 = vector.broadcast %42 : f32 to vector<256xf32>
    %44 = arith.mulf %15, %43 : vector<256xf32>
    %c3_19 = arith.constant 3 : index
    %45 = memref.load %arg4[%c3_19] : memref<4xf32, #tpu.memory_space<smem>>
    %46 = vector.broadcast %45 : f32 to vector<256xf32>
    %47 = arith.mulf %15, %46 : vector<256xf32>
    %c1_20 = arith.constant 1 : index
    %48 = memref.load %arg5[%c1_20] : memref<4xf32, #tpu.memory_space<smem>>
    %49 = vector.broadcast %48 : f32 to vector<256xf32>
    %50 = arith.addf %44, %49 : vector<256xf32>
    %c3_21 = arith.constant 3 : index
    %51 = memref.load %arg5[%c3_21] : memref<4xf32, #tpu.memory_space<smem>>
    %52 = vector.broadcast %51 : f32 to vector<256xf32>
    %53 = arith.addf %47, %52 : vector<256xf32>
    %cst_22 = arith.constant 0.000000e+00 : f32
    %54 = vector.broadcast %cst_22 : f32 to vector<256xf32>
    %55 = arith.subf %54, %50 : vector<256xf32>
    %56 = math.exp %55 : vector<256xf32>
    %cst_23 = arith.constant 1.000000e+00 : f32
    %57 = vector.broadcast %cst_23 : f32 to vector<256xf32>
    %58 = arith.addf %57, %56 : vector<256xf32>
    %cst_24 = arith.constant 1.000000e+00 : f32
    %59 = vector.broadcast %cst_24 : f32 to vector<256xf32>
    %60 = arith.divf %59, %58 : vector<256xf32>
    %c0_25 = arith.constant 0 : index
    %c1_26 = arith.constant 1 : index
    %c0_27 = arith.constant 0 : index
    %61 = vector.load %arg1[%c0_25, %c1_26, %c0_27] : memref<1x4x256xf32, #tpu.memory_space<vmem>>, vector<1x1x256xf32>
    %62 = vector.shape_cast %61 : vector<1x1x256xf32> to vector<256xf32>
    %63 = arith.mulf %62, %60 : vector<256xf32>
    %64 = arith.addf %63, %53 : vector<256xf32>
    %c0_28 = arith.constant 0 : index
    %c1_29 = arith.constant 1 : index
    %c0_30 = arith.constant 0 : index
    %65 = vector.load %arg10[%c0_28, %c1_29, %c0_30] : memref<1x4x256xf32, #tpu.memory_space<vmem>>, vector<1x1x256xf32>
    %66 = vector.shape_cast %65 : vector<1x1x256xf32> to vector<256xf32>
    %67 = vector.shape_cast %64 : vector<256xf32> to vector<1x1x256xf32>
    tpu.vector_store %arg10[%c0_28, %c1_29, %c0_30], %67 {strides = array<i32>} : memref<1x4x256xf32, #tpu.memory_space<vmem>>, vector<1x1x256xf32>,
    %c0_31 = arith.constant 0 : index
    %c0_32 = arith.constant 0 : index
    %c0_33 = arith.constant 0 : index
    %68 = vector.load %arg1[%c0_31, %c0_32, %c0_33] : memref<1x4x256xf32, #tpu.memory_space<vmem>>, vector<1x1x256xf32>
    %69 = vector.shape_cast %68 : vector<1x1x256xf32> to vector<256xf32>
    %c0_34 = arith.constant 0 : index
    %c1_35 = arith.constant 1 : index
    %c0_36 = arith.constant 0 : index
    %70 = vector.load %arg1[%c0_34, %c1_35, %c0_36] : memref<1x4x256xf32, #tpu.memory_space<vmem>>, vector<1x1x256xf32>
    %71 = vector.shape_cast %70 : vector<1x1x256xf32> to vector<256xf32>
    %c0_37 = arith.constant 0 : index
    %72 = memref.load %arg6[%c0_37] : memref<2xf32, #tpu.memory_space<smem>>
    %73 = vector.broadcast %72 : f32 to vector<256xf32>
    %74 = arith.mulf %69, %73 : vector<256xf32>
    %c1_38 = arith.constant 1 : index
    %75 = memref.load %arg6[%c1_38] : memref<2xf32, #tpu.memory_space<smem>>
    %76 = vector.broadcast %75 : f32 to vector<256xf32>
    %77 = arith.mulf %71, %76 : vector<256xf32>
    %78 = arith.addf %74, %77 : vector<256xf32>
    %c0_39 = arith.constant 0 : index
    %79 = memref.load %arg7[%c0_39] : memref<1xf32, #tpu.memory_space<smem>>
    %80 = vector.broadcast %79 : f32 to vector<256xf32>
    %81 = arith.addf %78, %80 : vector<256xf32>
    %cst_40 = arith.constant 0.000000e+00 : f32
    %82 = vector.broadcast %cst_40 : f32 to vector<256xf32>
    %83 = arith.maximumf %81, %82 : vector<256xf32>
    %c0_41 = arith.constant 0 : index
    %84 = memref.load %arg8[%c0_41] : memref<4xf32, #tpu.memory_space<smem>>
    %85 = vector.broadcast %84 : f32 to vector<256xf32>
    %86 = arith.mulf %83, %85 : vector<256xf32>
    %c2_42 = arith.constant 2 : index
    %87 = memref.load %arg8[%c2_42] : memref<4xf32, #tpu.memory_space<smem>>
    %88 = vector.broadcast %87 : f32 to vector<256xf32>
    %89 = arith.mulf %83, %88 : vector<256xf32>
    %c0_43 = arith.constant 0 : index
    %90 = memref.load %arg9[%c0_43] : memref<4xf32, #tpu.memory_space<smem>>
    %91 = vector.broadcast %90 : f32 to vector<256xf32>
    %92 = arith.addf %86, %91 : vector<256xf32>
    %c2_44 = arith.constant 2 : index
    %93 = memref.load %arg9[%c2_44] : memref<4xf32, #tpu.memory_space<smem>>
    %94 = vector.broadcast %93 : f32 to vector<256xf32>
    %95 = arith.addf %89, %94 : vector<256xf32>
    %cst_45 = arith.constant 0.000000e+00 : f32
    %96 = vector.broadcast %cst_45 : f32 to vector<256xf32>
    %97 = arith.subf %96, %92 : vector<256xf32>
    %98 = math.exp %97 : vector<256xf32>
    %cst_46 = arith.constant 1.000000e+00 : f32
    %99 = vector.broadcast %cst_46 : f32 to vector<256xf32>
    %100 = arith.addf %99, %98 : vector<256xf32>
    %cst_47 = arith.constant 1.000000e+00 : f32
    %101 = vector.broadcast %cst_47 : f32 to vector<256xf32>
    %102 = arith.divf %101, %100 : vector<256xf32>
    %c0_48 = arith.constant 0 : index
    %c2_49 = arith.constant 2 : index
    %c0_50 = arith.constant 0 : index
    %103 = vector.load %arg1[%c0_48, %c2_49, %c0_50] : memref<1x4x256xf32, #tpu.memory_space<vmem>>, vector<1x1x256xf32>
    %104 = vector.shape_cast %103 : vector<1x1x256xf32> to vector<256xf32>
    %105 = arith.mulf %104, %102 : vector<256xf32>
    %106 = arith.addf %105, %95 : vector<256xf32>
    %c0_51 = arith.constant 0 : index
    %c2_52 = arith.constant 2 : index
    %c0_53 = arith.constant 0 : index
    %107 = vector.load %arg10[%c0_51, %c2_52, %c0_53] : memref<1x4x256xf32, #tpu.memory_space<vmem>>, vector<1x1x256xf32>
    %108 = vector.shape_cast %107 : vector<1x1x256xf32> to vector<256xf32>
    %109 = vector.shape_cast %106 : vector<256xf32> to vector<1x1x256xf32>
    tpu.vector_store %arg10[%c0_51, %c2_52, %c0_53], %109 {strides = array<i32>} : memref<1x4x256xf32, #tpu.memory_space<vmem>>, vector<1x1x256xf32>,
    %c1_54 = arith.constant 1 : index
    %110 = memref.load %arg8[%c1_54] : memref<4xf32, #tpu.memory_space<smem>>
    %111 = vector.broadcast %110 : f32 to vector<256xf32>
    %112 = arith.mulf %83, %111 : vector<256xf32>
    %c3_55 = arith.constant 3 : index
    %113 = memref.load %arg8[%c3_55] : memref<4xf32, #tpu.memory_space<smem>>
    %114 = vector.broadcast %113 : f32 to vector<256xf32>
    %115 = arith.mulf %83, %114 : vector<256xf32>
    %c1_56 = arith.constant 1 : index
    %116 = memref.load %arg9[%c1_56] : memref<4xf32, #tpu.memory_space<smem>>
    %117 = vector.broadcast %116 : f32 to vector<256xf32>
    %118 = arith.addf %112, %117 : vector<256xf32>
    %c3_57 = arith.constant 3 : index
    %119 = memref.load %arg9[%c3_57] : memref<4xf32, #tpu.memory_space<smem>>
    %120 = vector.broadcast %119 : f32 to vector<256xf32>
    %121 = arith.addf %115, %120 : vector<256xf32>
    %cst_58 = arith.constant 0.000000e+00 : f32
    %122 = vector.broadcast %cst_58 : f32 to vector<256xf32>
    %123 = arith.subf %122, %118 : vector<256xf32>
    %124 = math.exp %123 : vector<256xf32>
    %cst_59 = arith.constant 1.000000e+00 : f32
    %125 = vector.broadcast %cst_59 : f32 to vector<256xf32>
    %126 = arith.addf %125, %124 : vector<256xf32>
    %cst_60 = arith.constant 1.000000e+00 : f32
    %127 = vector.broadcast %cst_60 : f32 to vector<256xf32>
    %128 = arith.divf %127, %126 : vector<256xf32>
    %c0_61 = arith.constant 0 : index
    %c3_62 = arith.constant 3 : index
    %c0_63 = arith.constant 0 : index
    %129 = vector.load %arg1[%c0_61, %c3_62, %c0_63] : memref<1x4x256xf32, #tpu.memory_space<vmem>>, vector<1x1x256xf32>
    %130 = vector.shape_cast %129 : vector<1x1x256xf32> to vector<256xf32>
    %131 = arith.mulf %130, %128 : vector<256xf32>
    %132 = arith.addf %131, %121 : vector<256xf32>
    %c0_64 = arith.constant 0 : index
    %c3_65 = arith.constant 3 : index
    %c0_66 = arith.constant 0 : index
    %133 = vector.load %arg10[%c0_64, %c3_65, %c0_66] : memref<1x4x256xf32, #tpu.memory_space<vmem>>, vector<1x1x256xf32>
    %134 = vector.shape_cast %133 : vector<1x1x256xf32> to vector<256xf32>
    %135 = vector.shape_cast %132 : vector<256xf32> to vector<1x1x256xf32>
    tpu.vector_store %arg10[%c0_64, %c3_65, %c0_66], %135 {strides = array<i32>} : memref<1x4x256xf32, #tpu.memory_space<vmem>>, vector<1x1x256xf32>,
    return
  }
  func.func @transform_0(%arg0: i32) -> (i32, i32, i32) {
    %c0_i32 = arith.constant 0 : i32
    %c0_i32_0 = arith.constant 0 : i32
    %c0_i32_1 = arith.constant 0 : i32
    return %arg0, %c0_i32, %c0_i32_0 : i32, i32, i32
  }
  func.func @transform_1(%arg0: i32) -> i32 {
    %c0_i32 = arith.constant 0 : i32
    %c0_i32_0 = arith.constant 0 : i32
    return %c0_i32 : i32
  }
  func.func @transform_2(%arg0: i32) -> i32 {
    %c0_i32 = arith.constant 0 : i32
    %c0_i32_0 = arith.constant 0 : i32
    return %c0_i32 : i32
  }
  func.func @transform_3(%arg0: i32) -> i32 {
    %c0_i32 = arith.constant 0 : i32
    %c0_i32_0 = arith.constant 0 : i32
    return %c0_i32 : i32
  }
  func.func @transform_4(%arg0: i32) -> i32 {
    %c0_i32 = arith.constant 0 : i32
    %c0_i32_0 = arith.constant 0 : i32
    return %c0_i32 : i32
  }
  func.func @transform_5(%arg0: i32) -> i32 {
    %c0_i32 = arith.constant 0 : i32
    %c0_i32_0 = arith.constant 0 : i32
    return %c0_i32 : i32
  }
  func.func @transform_6(%arg0: i32) -> i32 {
    %c0_i32 = arith.constant 0 : i32
    %c0_i32_0 = arith.constant 0 : i32
    return %c0_i32 : i32
  }
  func.func @transform_7(%arg0: i32) -> i32 {
    %c0_i32 = arith.constant 0 : i32
    %c0_i32_0 = arith.constant 0 : i32
    return %c0_i32 : i32
  }
  func.func @transform_8(%arg0: i32) -> i32 {
    %c0_i32 = arith.constant 0 : i32
    %c0_i32_0 = arith.constant 0 : i32
    return %c0_i32 : i32
  }
  func.func @transform_9(%arg0: i32) -> (i32, i32, i32) {
    %c0_i32 = arith.constant 0 : i32
    %c0_i32_0 = arith.constant 0 : i32
    %c0_i32_1 = arith.constant 0 : i32
    return %arg0, %c0_i32, %c0_i32_0 : i32, i32, i32
  }
}

</mosaic_0001>

<llo_original>
// kernel: tpu_custom_call.1
$region0: #{tpu_custom_call.1}
  #allocation0 [shape = 'u32[]', space=smem, size = 0x4, offset = 0x4, fixed_abs, tag = 'smem constant byte address 0x4 - core index']
  #allocation1 [shape = 'u32[144,128]{1,0:T(1,128)}', space=vmem, size = 0x12000, scoped, tag = 'internal scratch']
  #allocation2 [shape = 'f32[1]{0:T(128)S(6)}', space=smem, size = 0x200, scoped, tag = 'scoped memory for tpu_custom_call.1']
  #allocation3 [shape = 'f32[1]{0:T(128)S(6)}', space=smem, size = 0x200, scoped, tag = 'scoped memory for tpu_custom_call.1']
  %s0 = inlined_call_operand.hbm [shape: f32[2,4,256], index: 0, kind: input, shape index: {}]
  %s1 = inlined_call_operand.vmem [shape: f32[2], index: 1, kind: input, shape index: {}]
  %s2 = inlined_call_operand.<no memory space> [shape: f32[1], index: 2, kind: input, shape index: {}]
  %s3 = inlined_call_operand.vmem [shape: f32[4], index: 3, kind: input, shape index: {}]
  %s4 = inlined_call_operand.vmem [shape: f32[4], index: 4, kind: input, shape index: {}]
  %s5 = inlined_call_operand.vmem [shape: f32[2], index: 5, kind: input, shape index: {}]
  %s6 = inlined_call_operand.<no memory space> [shape: f32[1], index: 6, kind: input, shape index: {}]
  %s7 = inlined_call_operand.vmem [shape: f32[4], index: 7, kind: input, shape index: {}]
  %s8 = inlined_call_operand.vmem [shape: f32[4], index: 8, kind: input, shape index: {}]
  %s9 = inlined_call_operand.hbm [shape: f32[2,4,256], index: 9, kind: output, shape index: {}]
  %s10 = sld [smem:[#allocation0]]
  $region97: #{tpu_custom_call.1} parent=0
    _
  %s12 = ssub.s32 1, %s10
  %s13 = scalar_select 0, %s12, %s10
  %14 = sst [smem:[#allocation2]] %s2
  %15 = sst [smem:[#allocation3]] %s6
  $region1: #{tpu_custom_call.1} parent=0
    #allocation4 [shape = 'u8[8192]{0}', space=vmem, size = 0x2000, scoped, tag = 'input window, operand 0']
    #allocation5 [shape = 's32[2]{0}', space=sflag, size = 0x8, scoped, tag = 'scoped memory for tpu_custom_call.1']
    #allocation6 [shape = 's32[2]{0}', space=sflag, size = 0x8, scoped, tag = 'scoped memory for tpu_custom_call.1']
    #allocation7 [shape = 's32[2]{0}', space=sflag, size = 0x8, scoped, tag = 'scoped memory for tpu_custom_call.1']
    #allocation8 [shape = 'u8[512]{0}', space=smem, size = 0x200, scoped, tag = 'input window, operand 1, single buffered']
    #allocation9 [shape = 'u8[512]{0}', space=smem, size = 0x200, scoped, tag = 'input window, operand 3, single buffered']
    #allocation10 [shape = 's32[1]{0}', space=sflag, size = 0x4, scoped, tag = 'scoped memory for tpu_custom_call.1']
    #allocation11 [shape = 'u8[512]{0}', space=smem, size = 0x200, scoped, tag = 'input window, operand 4, single buffered']
    #allocation12 [shape = 'u8[512]{0}', space=smem, size = 0x200, scoped, tag = 'input window, operand 5, single buffered']
    #allocation13 [shape = 's32[1]{0}', space=sflag, size = 0x4, scoped, tag = 'scoped memory for tpu_custom_call.1']
    #allocation14 [shape = 'u8[512]{0}', space=smem, size = 0x200, scoped, tag = 'input window, operand 7, single buffered']
    #allocation15 [shape = 'u8[512]{0}', space=smem, size = 0x200, scoped, tag = 'input window, operand 8, single buffered']
    #allocation16 [shape = 's32[1]{0}', space=sflag, size = 0x4, scoped, tag = 'scoped memory for tpu_custom_call.1']
    #allocation17 [shape = 'u8[8192]{0}', space=vmem, size = 0x2000, scoped, tag = 'output window, operand 0']
    %16 = vsyncpa [#allocation5], 0
    %s17 = scalar_lea.sflag [#allocation5], 1
    %18 = vsyncpa %s17, 0
    %19 = vsyncpa [#allocation7], 0
    %20 = vsyncpa [#allocation10], 0
    %21 = vsyncpa [#allocation13], 0
    %22 = vsyncpa [#allocation16], 0
    %23 = vsyncpa [#allocation6], 0
    %s24 = scalar_lea.sflag [#allocation6], 1
    %25 = vsyncpa %s24, 0
    loop: start=0, step=1, limit=4
    $region2: #{tpu_custom_call.1} parent=1 // loop_pre_header
      _
    $region3: #{tpu_custom_call.1} parent=1 // loop_header
      %s27 = sphi 0, %s31
      %p28 = scmp.ge.s32.totalorder %s27, 4
      %s37 = sphi 0, %s39
      %s40 = sphi 0, %s37
      %s41 = sphi 0, %s40
      %s57 = sphi 0, %s41
      %s61 = sphi 0, %s61
      %s63 = sphi 0, %s61
      %s64 = sphi 0, %s63
      %s78 = sphi 0, %s64
      %s82 = sphi 0, %s82
      %s84 = sphi 0, %s82
      %s85 = sphi 0, %s84
      %s99 = sphi 0, %s85
      %s103 = sphi 0, %s103
      %s105 = sphi 0, %s103
      %s106 = sphi 0, %s105
      %s120 = sphi 0, %s106
      %s124 = sphi 0, %s124
      %s126 = sphi 0, %s124
      %s127 = sphi 0, %s126
      %s141 = sphi 0, %s127
      %s145 = sphi 0, %s145
      %s147 = sphi 0, %s145
      %s148 = sphi 0, %s147
      %s162 = sphi 0, %s148
      %s166 = sphi 0, %s166
      %s168 = sphi 0, %s166
      %s169 = sphi 0, %s168
      %s183 = sphi 0, %s169
      %s187 = sphi 0, %s187
      %s189 = sphi 0, %s187
      %s190 = sphi 0, %s189
      %s204 = sphi 0, %s190
      %s208 = sphi 0, %s208
      %s210 = sphi 0, %s208
      %s211 = sphi 0, %s210
      %s225 = sphi 0, %s211
      %s231 = sphi 0, %s233
      %s234 = sphi 0, %s231
      %s235 = sphi 0, %s234
      %s251 = sphi 0, %s235
    $region4: #{tpu_custom_call.1} parent=1 // loop_header_branch
      %30 = sbr.rel (%p28) target = $region8
    $region5: #{tpu_custom_call.1} parent=1 // loop_body
      %s32 = ssub.s32 %s27, 1
      %s33 = ssub.s32 %s27, 2
      %s34 = sadd.s32 %s27, 1
      %s35 = ssub.s32 %s27, %s34
      %p36 = scmp.eq.s32.totalorder %s35, 0
      %s38 = sadd.s32 %s37, 1
      %s39 = scalar_select %p36, %s37, %s38
      %p42 = pneg %p36
      %p43 = scmp.eq.s32.totalorder %s27, 1
      %p44 = por %p42, %p43
      %p45 = scmp.ne.s32.totalorder %s37, %s40
      %p46 = scmp.eq.s32.totalorder %s27, 0
      %p47 = por %p45, %p46
      %p48 = scmp.ne.s32.totalorder %s37, %s40
      %p49 = scmp.eq.s32.totalorder %s32, 1
      %p50 = por %p48, %p49
      %p51 = scmp.ne.s32.totalorder %s40, %s41
      %p52 = scmp.eq.s32.totalorder %s32, 0
      %p53 = por %p51, %p52
      %p54 = scmp.ne.s32.totalorder %s40, %s41
      %p55 = scmp.eq.s32.totalorder %s33, 1
      %p56 = por %p54, %p55
      %p58 = scmp.ne.s32.totalorder %s41, %s57
      %p59 = scmp.eq.s32.totalorder %s33, 0
      %p60 = por %p58, %p59
      %s62 = sadd.s32 %s61, 1
      %p65 = scmp.eq.s32.totalorder %s27, 1
      %p66 = scmp.ne.s32.totalorder %s61, %s63
      %p67 = scmp.eq.s32.totalorder %s27, 0
      %p68 = por %p66, %p67
      %p69 = scmp.ne.s32.totalorder %s61, %s63
      %p70 = scmp.eq.s32.totalorder %s32, 1
      %p71 = por %p69, %p70
      %p72 = scmp.ne.s32.totalorder %s63, %s64
      %p73 = scmp.eq.s32.totalorder %s32, 0
      %p74 = por %p72, %p73
      %p75 = scmp.ne.s32.totalorder %s63, %s64
      %p76 = scmp.eq.s32.totalorder %s33, 1
      %p77 = por %p75, %p76
      %p79 = scmp.ne.s32.totalorder %s64, %s78
      %p80 = scmp.eq.s32.totalorder %s33, 0
      %p81 = por %p79, %p80
      %s83 = sadd.s32 %s82, 1
      %p86 = scmp.eq.s32.totalorder %s27, 1
      %p87 = scmp.ne.s32.totalorder %s82, %s84
      %p88 = scmp.eq.s32.totalorder %s27, 0
      %p89 = por %p87, %p88
      %p90 = scmp.ne.s32.totalorder %s82, %s84
      %p91 = scmp.eq.s32.totalorder %s32, 1
      %p92 = por %p90, %p91
      %p93 = scmp.ne.s32.totalorder %s84, %s85
      %p94 = scmp.eq.s32.totalorder %s32, 0
      %p95 = por %p93, %p94
      %p96 = scmp.ne.s32.totalorder %s84, %s85
      %p97 = scmp.eq.s32.totalorder %s33, 1
      %p98 = por %p96, %p97
      %p100 = scmp.ne.s32.totalorder %s85, %s99
      %p101 = scmp.eq.s32.totalorder %s33, 0
      %p102 = por %p100, %p101
      %s104 = sadd.s32 %s103, 1
      %p107 = scmp.eq.s32.totalorder %s27, 1
      %p108 = scmp.ne.s32.totalorder %s103, %s105
      %p109 = scmp.eq.s32.totalorder %s27, 0
      %p110 = por %p108, %p109
      %p111 = scmp.ne.s32.totalorder %s103, %s105
      %p112 = scmp.eq.s32.totalorder %s32, 1
      %p113 = por %p111, %p112
      %p114 = scmp.ne.s32.totalorder %s105, %s106
      %p115 = scmp.eq.s32.totalorder %s32, 0
      %p116 = por %p114, %p115
      %p117 = scmp.ne.s32.totalorder %s105, %s106
      %p118 = scmp.eq.s32.totalorder %s33, 1
      %p119 = por %p117, %p118
      %p121 = scmp.ne.s32.totalorder %s106, %s120
      %p122 = scmp.eq.s32.totalorder %s33, 0
      %p123 = por %p121, %p122
      %s125 = sadd.s32 %s124, 1
      %p128 = scmp.eq.s32.totalorder %s27, 1
      %p129 = scmp.ne.s32.totalorder %s124, %s126
      %p130 = scmp.eq.s32.totalorder %s27, 0
      %p131 = por %p129, %p130
      %p132 = scmp.ne.s32.totalorder %s124, %s126
      %p133 = scmp.eq.s32.totalorder %s32, 1
      %p134 = por %p132, %p133
      %p135 = scmp.ne.s32.totalorder %s126, %s127
      %p136 = scmp.eq.s32.totalorder %s32, 0
      %p137 = por %p135, %p136
      %p138 = scmp.ne.s32.totalorder %s126, %s127
      %p139 = scmp.eq.s32.totalorder %s33, 1
      %p140 = por %p138, %p139
      %p142 = scmp.ne.s32.totalorder %s127, %s141
      %p143 = scmp.eq.s32.totalorder %s33, 0
      %p144 = por %p142, %p143
      %s146 = sadd.s32 %s145, 1
      %p149 = scmp.eq.s32.totalorder %s27, 1
      %p150 = scmp.ne.s32.totalorder %s145, %s147
      %p151 = scmp.eq.s32.totalorder %s27, 0
      %p152 = por %p150, %p151
      %p153 = scmp.ne.s32.totalorder %s145, %s147
      %p154 = scmp.eq.s32.totalorder %s32, 1
      %p155 = por %p153, %p154
      %p156 = scmp.ne.s32.totalorder %s147, %s148
      %p157 = scmp.eq.s32.totalorder %s32, 0
      %p158 = por %p156, %p157
      %p159 = scmp.ne.s32.totalorder %s147, %s148
      %p160 = scmp.eq.s32.totalorder %s33, 1
      %p161 = por %p159, %p160
      %p163 = scmp.ne.s32.totalorder %s148, %s162
      %p164 = scmp.eq.s32.totalorder %s33, 0
      %p165 = por %p163, %p164
      %s167 = sadd.s32 %s166, 1
      %p170 = scmp.eq.s32.totalorder %s27, 1
      %p171 = scmp.ne.s32.totalorder %s166, %s168
      %p172 = scmp.eq.s32.totalorder %s27, 0
      %p173 = por %p171, %p172
      %p174 = scmp.ne.s32.totalorder %s166, %s168
      %p175 = scmp.eq.s32.totalorder %s32, 1
      %p176 = por %p174, %p175
      %p177 = scmp.ne.s32.totalorder %s168, %s169
      %p178 = scmp.eq.s32.totalorder %s32, 0
      %p179 = por %p177, %p178
      %p180 = scmp.ne.s32.totalorder %s168, %s169
      %p181 = scmp.eq.s32.totalorder %s33, 1
      %p182 = por %p180, %p181
      %p184 = scmp.ne.s32.totalorder %s169, %s183
      %p185 = scmp.eq.s32.totalorder %s33, 0
      %p186 = por %p184, %p185
      %s188 = sadd.s32 %s187, 1
      %p191 = scmp.eq.s32.totalorder %s27, 1
      %p192 = scmp.ne.s32.totalorder %s187, %s189
      %p193 = scmp.eq.s32.totalorder %s27, 0
      %p194 = por %p192, %p193
      %p195 = scmp.ne.s32.totalorder %s187, %s189
      %p196 = scmp.eq.s32.totalorder %s32, 1
      %p197 = por %p195, %p196
      %p198 = scmp.ne.s32.totalorder %s189, %s190
      %p199 = scmp.eq.s32.totalorder %s32, 0
      %p200 = por %p198, %p199
      %p201 = scmp.ne.s32.totalorder %s189, %s190
      %p202 = scmp.eq.s32.totalorder %s33, 1
      %p203 = por %p201, %p202
      %p205 = scmp.ne.s32.totalorder %s190, %s204
      %p206 = scmp.eq.s32.totalorder %s33, 0
      %p207 = por %p205, %p206
      %s209 = sadd.s32 %s208, 1
      %p212 = scmp.eq.s32.totalorder %s27, 1
      %p213 = scmp.ne.s32.totalorder %s208, %s210
      %p214 = scmp.eq.s32.totalorder %s27, 0
      %p215 = por %p213, %p214
      %p216 = scmp.ne.s32.totalorder %s208, %s210
      %p217 = scmp.eq.s32.totalorder %s32, 1
      %p218 = por %p216, %p217
      %p219 = scmp.ne.s32.totalorder %s210, %s211
      %p220 = scmp.eq.s32.totalorder %s32, 0
      %p221 = por %p219, %p220
      %p222 = scmp.ne.s32.totalorder %s210, %s211
      %p223 = scmp.eq.s32.totalorder %s33, 1
      %p224 = por %p222, %p223
      %p226 = scmp.ne.s32.totalorder %s211, %s225
      %p227 = scmp.eq.s32.totalorder %s33, 0
      %p228 = por %p226, %p227
      %s229 = ssub.s32 %s27, %s34
      %p230 = scmp.eq.s32.totalorder %s229, 0
      %s232 = sadd.s32 %s231, 1
      %s233 = scalar_select %p230, %s231, %s232
      %p236 = pneg %p230
      %p237 = scmp.eq.s32.totalorder %s27, 1
      %p238 = por %p236, %p237
      %p239 = scmp.ne.s32.totalorder %s231, %s234
      %p240 = scmp.eq.s32.totalorder %s27, 0
      %p241 = por %p239, %p240
      %p242 = scmp.ne.s32.totalorder %s231, %s234
      %p243 = scmp.eq.s32.totalorder %s32, 1
      %p244 = por %p242, %p243
      %p245 = scmp.ne.s32.totalorder %s234, %s235
      %p246 = scmp.eq.s32.totalorder %s32, 0
      %p247 = por %p245, %p246
      %p248 = scmp.ne.s32.totalorder %s234, %s235
      %p249 = scmp.eq.s32.totalorder %s33, 1
      %p250 = por %p248, %p249
      %p252 = scmp.ne.s32.totalorder %s235, %s251
      %p253 = scmp.eq.s32.totalorder %s33, 0
      %p254 = por %p252, %p253
      %p255 = scmp.le.s32.totalorder 1, %s27
      %p256 = scmp.lt.s32.totalorder %s27, 3
      %p257 = pnand %p255, %p256
      %p258 = pneg %p257
      // Predicated region
      $region9: #{tpu_custom_call.1} parent=5 // pred_check
        _
      $region10: #{tpu_custom_call.1} parent=5 // pred_check_branch
        %260 = sbr.rel (%p257) target = $region12
      $region11: #{tpu_custom_call.1} parent=5 // pred_region
        %s261 = ssub.s32 %s27, 1
        // Predicated region
        $region13: #{tpu_custom_call.1} parent=11 // pred_check
          %p262 = pneg %p74
        $region14: #{tpu_custom_call.1} parent=11 // pred_check_branch
          %264 = sbr.rel (%p262) target = $region16
        $region15: #{tpu_custom_call.1} parent=11 // pred_region
          %s266 = ssub.s32 16, 16
          %267 = vsyncadd [#allocation7], %s266
          %s269 = sshll.u32 %s1, 4
          %s270 = int_to_ptr.vmem [resolvable:$true] %s269
          %272 = dma.vmem_to_smem %s270, 16, [#allocation8], [#allocation7]
        $region16: #{tpu_custom_call.1} parent=11 // pred_fallthru
          _
        // Predicated region
        $region17: #{tpu_custom_call.1} parent=11 // pred_check
          %p273 = pneg %p95
        $region18: #{tpu_custom_call.1} parent=11 // pred_check_branch
          %275 = sbr.rel (%p273) target = $region20
        $region19: #{tpu_custom_call.1} parent=11 // pred_region
          _
        $region20: #{tpu_custom_call.1} parent=11 // pred_fallthru
          _
        // Predicated region
        $region21: #{tpu_custom_call.1} parent=11 // pred_check
          %p276 = pneg %p116
        $region22: #{tpu_custom_call.1} parent=11 // pred_check_branch
          %278 = sbr.rel (%p276) target = $region24
        $region23: #{tpu_custom_call.1} parent=11 // pred_region
          %s280 = ssub.s32 16, 16
          %281 = vsyncadd [#allocation10], %s280
          %s283 = sshll.u32 %s3, 4
          %s284 = int_to_ptr.vmem [resolvable:$true] %s283
          %286 = dma.vmem_to_smem %s284, 16, [#allocation9], [#allocation10]
        $region24: #{tpu_custom_call.1} parent=11 // pred_fallthru
          _
        // Predicated region
        $region25: #{tpu_custom_call.1} parent=11 // pred_check
          %p287 = pneg %p137
        $region26: #{tpu_custom_call.1} parent=11 // pred_check_branch
          %289 = sbr.rel (%p287) target = $region28
        $region27: #{tpu_custom_call.1} parent=11 // pred_region
          %s291 = ssub.s32 16, 16
          %292 = vsyncadd [#allocation10], %s291
          %s294 = sshll.u32 %s4, 4
          %s295 = int_to_ptr.vmem [resolvable:$true] %s294
          %297 = dma.vmem_to_smem %s295, 16, [#allocation11], [#allocation10]
        $region28: #{tpu_custom_call.1} parent=11 // pred_fallthru
          _
        // Predicated region
        $region29: #{tpu_custom_call.1} parent=11 // pred_check
          %p298 = pneg %p158
        $region30: #{tpu_custom_call.1} parent=11 // pred_check_branch
          %300 = sbr.rel (%p298) target = $region32
        $region31: #{tpu_custom_call.1} parent=11 // pred_region
          %s302 = ssub.s32 16, 16
          %303 = vsyncadd [#allocation13], %s302
          %s305 = sshll.u32 %s5, 4
          %s306 = int_to_ptr.vmem [resolvable:$true] %s305
          %308 = dma.vmem_to_smem %s306, 16, [#allocation12], [#allocation13]
        $region32: #{tpu_custom_call.1} parent=11 // pred_fallthru
          _
        // Predicated region
        $region33: #{tpu_custom_call.1} parent=11 // pred_check
          %p309 = pneg %p179
        $region34: #{tpu_custom_call.1} parent=11 // pred_check_branch
          %311 = sbr.rel (%p309) target = $region36
        $region35: #{tpu_custom_call.1} parent=11 // pred_region
          _
        $region36: #{tpu_custom_call.1} parent=11 // pred_fallthru
          _
        // Predicated region
        $region37: #{tpu_custom_call.1} parent=11 // pred_check
          %p312 = pneg %p200
        $region38: #{tpu_custom_call.1} parent=11 // pred_check_branch
          %314 = sbr.rel (%p312) target = $region40
        $region39: #{tpu_custom_call.1} parent=11 // pred_region
          %s316 = ssub.s32 16, 16
          %317 = vsyncadd [#allocation13], %s316
          %s319 = sshll.u32 %s7, 4
          %s320 = int_to_ptr.vmem [resolvable:$true] %s319
          %322 = dma.vmem_to_smem %s320, 16, [#allocation14], [#allocation13]
        $region40: #{tpu_custom_call.1} parent=11 // pred_fallthru
          _
        // Predicated region
        $region41: #{tpu_custom_call.1} parent=11 // pred_check
          %p323 = pneg %p221
        $region42: #{tpu_custom_call.1} parent=11 // pred_check_branch
          %325 = sbr.rel (%p323) target = $region44
        $region43: #{tpu_custom_call.1} parent=11 // pred_region
          %s327 = ssub.s32 16, 16
          %328 = vsyncadd [#allocation16], %s327
          %s330 = sshll.u32 %s8, 4
          %s331 = int_to_ptr.vmem [resolvable:$true] %s330
          %333 = dma.vmem_to_smem %s331, 16, [#allocation15], [#allocation16]
        $region44: #{tpu_custom_call.1} parent=11 // pred_fallthru
          _
      $region12: #{tpu_custom_call.1} parent=5 // pred_fallthru
        _
      %p334 = scmp.lt.s32.totalorder %s27, 2
      // Predicated region
      $region45: #{tpu_custom_call.1} parent=5 // pred_check
        %p335 = pneg %p334
      $region46: #{tpu_custom_call.1} parent=5 // pred_check_branch
        %337 = sbr.rel (%p335) target = $region48
      $region47: #{tpu_custom_call.1} parent=5 // pred_region
        // Predicated region
        $region49: #{tpu_custom_call.1} parent=47 // pred_check
          %p338 = pneg %p47
        $region50: #{tpu_custom_call.1} parent=47 // pred_check_branch
          %340 = sbr.rel (%p338) target = $region52
        $region51: #{tpu_custom_call.1} parent=47 // pred_region
          %s341 = sand.u32 %s37, 1
          %s342 = scalar_lea.sflag [#allocation5], %s341
          %s343 = sand.u32 %s37, 1
          %s344 = smul.addr %s343, 8
          %s345 = scalar_lea.vmem [#allocation4], %s344
          %s347 = ssub.s32 128, 128
          %348 = vsyncadd %s342, %s347
          %s349 = smul.addr %s27, 2
          %s350 = smul.addr %s349, 64
          %s351 = scalar_lea.hbm %s0, %s350
          %s353 = sshll.u32 %s345, 4
          %s354 = int_to_ptr.vmem [resolvable:$true] %s353
          %356 = dma.hbm_to_vmem [thread:$0]  %s351, 128, %s354, %s342
        $region52: #{tpu_custom_call.1} parent=47 // pred_fallthru
          _
      $region48: #{tpu_custom_call.1} parent=5 // pred_fallthru
        _
      %p357 = scmp.le.s32.totalorder 1, %s27
      %p358 = scmp.lt.s32.totalorder %s27, 3
      %p359 = pnand %p357, %p358
      %p360 = pneg %p359
      // Predicated region
      $region53: #{tpu_custom_call.1} parent=5 // pred_check
        _
      $region54: #{tpu_custom_call.1} parent=5 // pred_check_branch
        %362 = sbr.rel (%p359) target = $region56
      $region55: #{tpu_custom_call.1} parent=5 // pred_region
        %s363 = ssub.s32 %s27, 1
        %s364 = sand.u32 %s40, 1
        %s365 = scalar_lea.sflag [#allocation5], %s364
        %s366 = sand.u32 %s40, 1
        %s367 = smul.addr %s366, 8
        %s368 = scalar_lea.vmem [#allocation4], %s367
        // Predicated region
        $region57: #{tpu_custom_call.1} parent=55 // pred_check
          %p369 = pneg %p53
        $region58: #{tpu_custom_call.1} parent=55 // pred_check_branch
          %371 = sbr.rel (%p369) target = $region60
        $region59: #{tpu_custom_call.1} parent=55 // pred_region
          %372 = dma.done %s365, 128
        $region60: #{tpu_custom_call.1} parent=55 // pred_fallthru
          _
        // Predicated region
        $region61: #{tpu_custom_call.1} parent=55 // pred_check
          %p373 = pneg %p74
        $region62: #{tpu_custom_call.1} parent=55 // pred_check_branch
          %375 = sbr.rel (%p373) target = $region64
        $region63: #{tpu_custom_call.1} parent=55 // pred_region
          %376 = dma.done [#allocation7], 16
        $region64: #{tpu_custom_call.1} parent=55 // pred_fallthru
          _
        // Predicated region
        $region65: #{tpu_custom_call.1} parent=55 // pred_check
          %p377 = pneg %p116
        $region66: #{tpu_custom_call.1} parent=55 // pred_check_branch
          %379 = sbr.rel (%p377) target = $region68
        $region67: #{tpu_custom_call.1} parent=55 // pred_region
          %380 = dma.done [#allocation10], 16
        $region68: #{tpu_custom_call.1} parent=55 // pred_fallthru
          _
        // Predicated region
        $region69: #{tpu_custom_call.1} parent=55 // pred_check
          %p381 = pneg %p137
        $region70: #{tpu_custom_call.1} parent=55 // pred_check_branch
          %383 = sbr.rel (%p381) target = $region72
        $region71: #{tpu_custom_call.1} parent=55 // pred_region
          %384 = dma.done [#allocation10], 16
        $region72: #{tpu_custom_call.1} parent=55 // pred_fallthru
          _
        // Predicated region
        $region73: #{tpu_custom_call.1} parent=55 // pred_check
          %p385 = pneg %p158
        $region74: #{tpu_custom_call.1} parent=55 // pred_check_branch
          %387 = sbr.rel (%p385) target = $region76
        $region75: #{tpu_custom_call.1} parent=55 // pred_region
          %388 = dma.done [#allocation13], 16
        $region76: #{tpu_custom_call.1} parent=55 // pred_fallthru
          _
        // Predicated region
        $region77: #{tpu_custom_call.1} parent=55 // pred_check
          %p389 = pneg %p200
        $region78: #{tpu_custom_call.1} parent=55 // pred_check_branch
          %391 = sbr.rel (%p389) target = $region80
        $region79: #{tpu_custom_call.1} parent=55 // pred_region
          %392 = dma.done [#allocation13], 16
        $region80: #{tpu_custom_call.1} parent=55 // pred_fallthru
          _
        // Predicated region
        $region81: #{tpu_custom_call.1} parent=55 // pred_check
          %p393 = pneg %p221
        $region82: #{tpu_custom_call.1} parent=55 // pred_check_branch
          %395 = sbr.rel (%p393) target = $region84
        $region83: #{tpu_custom_call.1} parent=55 // pred_region
          %396 = dma.done [#allocation16], 16
        $region84: #{tpu_custom_call.1} parent=55 // pred_fallthru
          _
        %397 = sfence
        %s398 = sand.u32 %s40, 1
        %s399 = scalar_lea.sflag [#allocation5], %s398
        %s400 = sand.u32 %s40, 1
        %s401 = smul.addr %s400, 8
        %s402 = scalar_lea.vmem [#allocation4], %s401
        %p403 = pneg %p53
        %p404 = pneg %p50
        %p405 = pneg %p74
        %p406 = pneg %p71
        %p407 = pneg %p95
        %p408 = pneg %p92
        %p409 = pneg %p116
        %p410 = pneg %p113
        %p411 = pneg %p137
        %p412 = pneg %p134
        %p413 = pneg %p158
        %p414 = pneg %p155
        %p415 = pneg %p179
        %p416 = pneg %p176
        %p417 = pneg %p200
        %p418 = pneg %p197
        %p419 = pneg %p221
        %p420 = pneg %p218
        %p421 = pneg %p247
        %p422 = pneg %p244
        %s423 = sand.u32 %s234, 1
        %s424 = scalar_lea.sflag [#allocation6], %s423
        %s425 = sand.u32 %s234, 1
        %s426 = smul.addr %s425, 8
        %s427 = scalar_lea.vmem [#allocation17], %s426
        %s428 = scalar_lea.vmem %s368, 2 [#allocation4]
        %v429 = vld [vmem:[%s428] ss:$4 sm:$0x3]
        %s430 = scalar_lea.vmem %s368, 3 [#allocation4]
        %v431 = vld [vmem:[%s430] ss:$4 sm:$0x3]
        %s432 = sld [smem:[#allocation8]]
        %v433 = vstv %s432
        %v434 = vmul.f32 %v429, %v433
        %s435 = sld [smem:[#allocation8 + $0x1]]
        %v436 = vstv %s435
        %v437 = vmul.f32 %v431, %v436
        %v438 = vadd.f32 %v434, %v437
        %s439 = sld [smem:[#allocation2]]
        %v440 = vstv %s439
        %v441 = vadd.f32 %v438, %v440
        %v442 = vmax.f32 %v441, 0.0
        %s443 = sld [smem:[#allocation9]]
        %v444 = vstv %s443
        %v445 = vmul.f32 %v442, %v444
        %s446 = sld [smem:[#allocation9 + $0x2]]
        %v447 = vstv %s446
        %v448 = vmul.f32 %v442, %v447
        %s449 = sld [smem:[#allocation11]]
        %v450 = vstv %s449
        %v451 = vadd.f32 %v445, %v450
        %s452 = sld [smem:[#allocation11 + $0x2]]
        %v453 = vstv %s452
        %v454 = vadd.f32 %v448, %v453
        %v455 = vsub.f32 0.0, %v451
        %v456 = vmul.f32 %v455, 1.442695
        %v457 = vpow.pop %v456
        %v458 = vadd.f32 %v457, 1.0
        %v459 = vrcp.pop %v458
        %v460 = vmul.f32 1.0, %v459
        %v461 = vld [vmem:[%s368] ss:$4 sm:$0x3]
        %v462 = vmul.f32 %v461, %v460
        %v463 = vadd.f32 %v462, %v454
        %v464 = vlaneseq
        %vm465 = vcmp.ge.s32.totalorder %v464, 0
        %vm466 = vcmp.lt.s32.totalorder %v464, 256
        %vm467 = vmand %vm465, %vm466
        %468 = vst.msk [vmem:[%s427] ss:$4 sm:$0x3] %vm467, %v463
        %s469 = sld [smem:[#allocation9 + $0x1]]
        %v470 = vstv %s469
        %v471 = vmul.f32 %v442, %v470
        %s472 = sld [smem:[#allocation9 + $0x3]]
        %v473 = vstv %s472
        %v474 = vmul.f32 %v442, %v473
        %s475 = sld [smem:[#allocation11 + $0x1]]
        %v476 = vstv %s475
        %v477 = vadd.f32 %v471, %v476
        %s478 = sld [smem:[#allocation11 + $0x3]]
        %v479 = vstv %s478
        %v480 = vadd.f32 %v474, %v479
        %v481 = vsub.f32 0.0, %v477
        %v482 = vmul.f32 %v481, 1.442695
        %v483 = vpow.pop %v482
        %v484 = vadd.f32 %v483, 1.0
        %v485 = vrcp.pop %v484
        %v486 = vmul.f32 1.0, %v485
        %s487 = scalar_lea.vmem %s368, 1 [#allocation4]
        %v488 = vld [vmem:[%s487] ss:$4 sm:$0x3]
        %v489 = vmul.f32 %v488, %v486
        %v490 = vadd.f32 %v489, %v480
        %s491 = scalar_lea.vmem %s427, 1 [#allocation17]
        %492 = vst.msk [vmem:[%s491] ss:$4 sm:$0x3] %vm467, %v490
        %v493 = vld [vmem:[%s368] ss:$4 sm:$0x3]
        %v494 = vld [vmem:[%s487] ss:$4 sm:$0x3]
        %s495 = sld [smem:[#allocation12]]
        %v496 = vstv %s495
        %v497 = vmul.f32 %v493, %v496
        %s498 = sld [smem:[#allocation12 + $0x1]]
        %v499 = vstv %s498
        %v500 = vmul.f32 %v494, %v499
        %v501 = vadd.f32 %v497, %v500
        %s502 = sld [smem:[#allocation3]]
        %v503 = vstv %s502
        %v504 = vadd.f32 %v501, %v503
        %v505 = vmax.f32 %v504, 0.0
        %s506 = sld [smem:[#allocation14]]
        %v507 = vstv %s506
        %v508 = vmul.f32 %v505, %v507
        %s509 = sld [smem:[#allocation14 + $0x2]]
        %v510 = vstv %s509
        %v511 = vmul.f32 %v505, %v510
        %s512 = sld [smem:[#allocation15]]
        %v513 = vstv %s512
        %v514 = vadd.f32 %v508, %v513
        %s515 = sld [smem:[#allocation15 + $0x2]]
        %v516 = vstv %s515
        %v517 = vadd.f32 %v511, %v516
        %v518 = vsub.f32 0.0, %v514
        %v519 = vmul.f32 %v518, 1.442695
        %v520 = vpow.pop %v519
        %v521 = vadd.f32 %v520, 1.0
        %v522 = vrcp.pop %v521
        %v523 = vmul.f32 1.0, %v522
        %v524 = vld [vmem:[%s428] ss:$4 sm:$0x3]
        %v525 = vmul.f32 %v524, %v523
        %v526 = vadd.f32 %v525, %v517
        %s527 = scalar_lea.vmem %s427, 2 [#allocation17]
        %528 = vst.msk [vmem:[%s527] ss:$4 sm:$0x3] %vm467, %v526
        %s529 = sld [smem:[#allocation14 + $0x1]]
        %v530 = vstv %s529
        %v531 = vmul.f32 %v505, %v530
        %s532 = sld [smem:[#allocation14 + $0x3]]
        %v533 = vstv %s532
        %v534 = vmul.f32 %v505, %v533
        %s535 = sld [smem:[#allocation15 + $0x1]]
        %v536 = vstv %s535
        %v537 = vadd.f32 %v531, %v536
        %s538 = sld [smem:[#allocation15 + $0x3]]
        %v539 = vstv %s538
        %v540 = vadd.f32 %v534, %v539
        %v541 = vsub.f32 0.0, %v537
        %v542 = vmul.f32 %v541, 1.442695
        %v543 = vpow.pop %v542
        %v544 = vadd.f32 %v543, 1.0
        %v545 = vrcp.pop %v544
        %v546 = vmul.f32 1.0, %v545
        %v547 = vld [vmem:[%s430] ss:$4 sm:$0x3]
        %v548 = vmul.f32 %v547, %v546
        %v549 = vadd.f32 %v548, %v540
        %s550 = scalar_lea.vmem %s427, 3 [#allocation17]
        %551 = vst.msk [vmem:[%s550] ss:$4 sm:$0x3] %vm467, %v549
        %s552 = sand.u32 %s234, 1
        %s553 = scalar_lea.sflag [#allocation6], %s552
        %s554 = sand.u32 %s234, 1
        %s555 = smul.addr %s554, 8
        %s556 = scalar_lea.vmem [#allocation17], %s555
        // Predicated region
        $region85: #{tpu_custom_call.1} parent=55 // pred_check
          %p557 = pneg %p244
        $region86: #{tpu_custom_call.1} parent=55 // pred_check_branch
          %559 = sbr.rel (%p557) target = $region88
        $region87: #{tpu_custom_call.1} parent=55 // pred_region
          %s561 = ssub.s32 128, 128
          %562 = vsyncadd %s553, %s561
          %s563 = smul.addr %s32, 2
          %s564 = smul.addr %s563, 64
          %s565 = scalar_lea.hbm %s9, %s564
          %s567 = sshll.u32 %s556, 4
          %s568 = int_to_ptr.vmem [resolvable:$true] %s567
          %570 = dma.vmem_to_hbm [thread:$0]  %s568, 128, %s565, %s553
        $region88: #{tpu_custom_call.1} parent=55 // pred_fallthru
          _
      $region56: #{tpu_custom_call.1} parent=5 // pred_fallthru
        _
      %p571 = scmp.le.s32.totalorder 2, %s27
      // Predicated region
      $region89: #{tpu_custom_call.1} parent=5 // pred_check
        %p572 = pneg %p571
      $region90: #{tpu_custom_call.1} parent=5 // pred_check_branch
        %574 = sbr.rel (%p572) target = $region92
      $region91: #{tpu_custom_call.1} parent=5 // pred_region
        %s575 = ssub.s32 %s27, 2
        // Predicated region
        $region93: #{tpu_custom_call.1} parent=91 // pred_check
          %p576 = pneg %p250
        $region94: #{tpu_custom_call.1} parent=91 // pred_check_branch
          %578 = sbr.rel (%p576) target = $region96
        $region95: #{tpu_custom_call.1} parent=91 // pred_region
          %s579 = sand.u32 %s235, 1
          %s580 = scalar_lea.sflag [#allocation6], %s579
          %s581 = sand.u32 %s235, 1
          %s582 = smul.addr %s581, 8
          %s583 = scalar_lea.vmem [#allocation17], %s582
          %584 = dma.done %s580, 128
        $region96: #{tpu_custom_call.1} parent=91 // pred_fallthru
          _
      $region92: #{tpu_custom_call.1} parent=5 // pred_fallthru
        _
    $region6: #{tpu_custom_call.1} parent=1 // loop_footer
      %s31 = sadd.s32 1, %s27
    $region7: #{tpu_custom_call.1} parent=1 // loop_footer_branch
      %26 = sbr.rel target = $region3
    $region8: #{tpu_custom_call.1} parent=1 // loop_exit
      _
    %585 = vsyncpa [#allocation5], 1
    %s586 = scalar_lea.sflag [#allocation5], 1
    %587 = vsyncpa %s586, 1
    %588 = vsyncpa [#allocation6], 1
    %s589 = scalar_lea.sflag [#allocation6], 1
    %590 = vsyncpa %s589, 1
    %591 = vsyncpa [#allocation7], 1
    %s592 = scalar_lea.sflag [#allocation7], 1
    %593 = vsyncpa %s592, 1
    %594 = vsyncpa [#allocation10], 1
    %595 = vsyncpa [#allocation13], 1
    %596 = vsyncpa [#allocation16], 1

</llo_original>
